<compile_context>
chip_gen: v7x
topology: tpu7x:2x2x1
jax: 0.10.0
libtpu: 0.0.40
codegen_flags: <defaults>
</compile_context>

<pallas_src>
import jax
import jax.numpy as jnp
from jax.experimental import pallas as pl
from jax.experimental.pallas import tpu as pltpu

WIN_LEN = 2
IN_DIM = 7 * (WIN_LEN + 17)   # 133
HID_DIM = 250
OUT_DIM = 10

HID_P = 256                   # lane-dense hidden width (250 -> 256, zero-padded)
BM_MAX = 2048                 # batch-tile cap; << VMEM on v5e/v6e/v7x
SPLIT_MIN_BATCH = 512         # only split the grid on dual-TC chips above this


def _mlp_kernel(x_ref, w1_ref, b1_ref, w2_ref, b2_ref, o_ref):
    # y = relu(x @ W1 + b1) @ W2 + b2 ; bf16 MXU operands, f32 accumulation.
    x = x_ref[...].astype(jnp.bfloat16)                          # (bm, 133)
    h = jnp.dot(x, w1_ref[...], preferred_element_type=jnp.float32)
    h = jnp.maximum(h + b1_ref[...], 0.0).astype(jnp.bfloat16)   # (bm, HID_P)
    y = jnp.dot(h, w2_ref[...], preferred_element_type=jnp.float32)
    o_ref[...] = (y + b2_ref[...]).astype(o_ref.dtype)           # (bm, OUT_DIM)


def _round_up(n, m):
    return ((n + m - 1) // m) * m


def _device_kind():
    try:
        return jax.devices()[0].device_kind.lower()
    except Exception:
        return ""


def _choose_bm(batch):
    """Batch tile: one block on single-TC chips / small batches; >=2 parallel
    tiles only on dual-TC (v7x) when each core gets substantial work."""
    kind = _device_kind()
    dual_tc = "v7" in kind                    # v5e/v6e: 1 TC; v7x: 2 TC/chip
    align = 128 if "v5" in kind else 256      # fill the MXU M pass per chip gen
    if batch <= BM_MAX and not (dual_tc and batch >= SPLIT_MIN_BATCH):
        return batch                          # full-extent block, layout-legal
    n_splits = max(2 if dual_tc else 1, -(-batch // BM_MAX))
    return min(BM_MAX, _round_up(-(-batch // n_splits), align))


def prepare_params(w1, b1, w2, b2):
    """One-time padding + bf16 cast (hoisted out of the per-call forward).

    w1: (IN_DIM, HID_DIM), w2: (HID_DIM, OUT_DIM), b*: (1, dim).
    Zero-padding the extra hidden rows/cols keeps the math identical.
    """
    w1p = jnp.pad(w1, ((0, 0), (0, HID_P - HID_DIM))).astype(jnp.bfloat16)   # (133, 256)
    b1p = jnp.pad(b1, ((0, 0), (0, HID_P - HID_DIM))).astype(jnp.float32)    # (1, 256)
    w2p = jnp.pad(w2, ((0, HID_P - HID_DIM), (0, 0))).astype(jnp.bfloat16)   # (256, 10)
    b2p = b2.astype(jnp.float32)                                             # (1, 10)
    return w1p, b1p, w2p, b2p


@jax.jit
def ai_model_forward(x, w1p, b1p, w2p, b2p):
    """x: (B, IN_DIM) f32; pre-padded params from prepare_params -> (B, OUT_DIM) f32."""
    B = x.shape[0]
    bm = _choose_bm(B)
    # Ragged last block (B % bm != 0): out-of-bounds rows are read-garbage but
    # write-masked by Pallas; rows are independent and o_ref is write-only.
    return pl.pallas_call(
        _mlp_kernel,
        out_shape=jax.ShapeDtypeStruct((B, OUT_DIM), jnp.float32),
        grid=(pl.cdiv(B, bm),),
        in_specs=[
            pl.BlockSpec((bm, IN_DIM), lambda i: (i, 0)),       # x tile (unpadded)
            pl.BlockSpec((IN_DIM, HID_P), lambda i: (0, 0)),    # W1 (resident)
            pl.BlockSpec((1, HID_P), lambda i: (0, 0)),         # b1 (resident)
            pl.BlockSpec((HID_P, OUT_DIM), lambda i: (0, 0)),   # W2 (resident)
            pl.BlockSpec((1, OUT_DIM), lambda i: (0, 0)),       # b2 (resident)
        ],
        out_specs=pl.BlockSpec((bm, OUT_DIM), lambda i: (i, 0)),
        compiler_params=pltpu.CompilerParams(
            dimension_semantics=("parallel",)),
    )(x, w1p, b1p, w2p, b2p)


def init_params(key):
    """Matches nn.Linear default init U(-1/sqrt(fan_in), +1/sqrt(fan_in));
    weights stored pre-transposed as [in, out] so x @ W == PyTorch x @ W.T."""
    k1, k2, k3, k4 = jax.random.split(key, 4)
    lim1 = 1.0 / jnp.sqrt(jnp.float32(IN_DIM))
    lim2 = 1.0 / jnp.sqrt(jnp.float32(HID_DIM))
    w1 = jax.random.uniform(k1, (IN_DIM, HID_DIM), jnp.float32, -lim1, lim1)
    b1 = jax.random.uniform(k2, (1, HID_DIM), jnp.float32, -lim1, lim1)
    w2 = jax.random.uniform(k3, (HID_DIM, OUT_DIM), jnp.float32, -lim2, lim2)
    b2 = jax.random.uniform(k4, (1, OUT_DIM), jnp.float32, -lim2, lim2)
    return w1, b1, w2, b2


# TODO(synk): the surrounding game-simulation / feature-extraction / genetic
# mutation code is host-side NumPy control flow, not part of AiModel.forward,
# and is intentionally not translated to Pallas.

if __name__ == "__main__":
    key = jax.random.PRNGKey(0)
    k_x, k_p = jax.random.split(key)

    batch = 32  # small batch of (scaled, flattened) poker feature vectors
    x = jax.random.normal(k_x, (batch, IN_DIM), jnp.float32)
    w1, b1, w2, b2 = init_params(k_p)

    # Pad/cast the parameters ONCE (outside the per-call forward).
    params = prepare_params(w1, b1, w2, b2)
    params = tuple(jax.block_until_ready(p) for p in params)

    out = ai_model_forward(x, *params)
    out = jax.block_until_ready(out)
    assert out.shape == (batch, OUT_DIM)

    # Reference 1: same math as the kernel (bf16 MXU operands, f32 accumulate).
    h_ref = jnp.maximum(
        jnp.dot(x.astype(jnp.bfloat16), w1.astype(jnp.bfloat16),
                preferred_element_type=jnp.float32) + b1, 0.0)
    ref_bf16 = jnp.dot(h_ref.astype(jnp.bfloat16), w2.astype(jnp.bfloat16),
                       preferred_element_type=jnp.float32) + b2
    assert jnp.allclose(out, ref_bf16, atol=1e-3, rtol=1e-3)

    # Reference 2: full-f32 forward (module semantics), loose tol for bf16 cast.
    ref_f32 = jnp.maximum(x @ w1 + b1, 0.0) @ w2 + b2
    assert jnp.allclose(out, ref_f32, atol=2e-2, rtol=2e-2)

    print("KERNEL_OK")
</pallas_src>

<mosaic_0001>
module attributes {stable_mosaic.version = 11 : i64} {
  func.func @_mlp_kernel(%arg0: i32, %arg1: memref<32x133xf32, #tpu.memory_space<vmem>>, %arg2: memref<133x256xbf16, #tpu.memory_space<vmem>>, %arg3: memref<1x256xf32, #tpu.memory_space<vmem>>, %arg4: memref<256x10xbf16, #tpu.memory_space<vmem>>, %arg5: memref<1x10xf32, #tpu.memory_space<vmem>>, %arg6: memref<32x10xf32, #tpu.memory_space<vmem>>) attributes {dimension_semantics = [#tpu.dimension_semantics<parallel>], iteration_bounds = array<i64: 1>, scalar_prefetch = 0 : i64, scratch_operands = 0 : i64, tpu.core_type = #tpu.core_type<tc>, window_params = [{transform_indices = @transform_0, window_bounds = array<i64: 32, 133>}, {pipeline_mode = #tpu.pipeline_mode<synchronous>, transform_indices = @transform_1, window_bounds = array<i64: 133, 256>}, {pipeline_mode = #tpu.pipeline_mode<synchronous>, transform_indices = @transform_2, window_bounds = array<i64: 1, 256>}, {pipeline_mode = #tpu.pipeline_mode<synchronous>, transform_indices = @transform_3, window_bounds = array<i64: 256, 10>}, {pipeline_mode = #tpu.pipeline_mode<synchronous>, transform_indices = @transform_4, window_bounds = array<i64: 1, 10>}, {transform_indices = @transform_5, window_bounds = array<i64: 32, 10>}]} {
    %c0 = arith.constant 0 : index
    %c0_0 = arith.constant 0 : index
    %0 = vector.load %arg1[%c0, %c0_0] : memref<32x133xf32, #tpu.memory_space<vmem>>, vector<32x133xf32>
    %1 = arith.truncf %0 : vector<32x133xf32> to vector<32x133xbf16>
    %c0_1 = arith.constant 0 : index
    %c0_2 = arith.constant 0 : index
    %2 = vector.load %arg2[%c0_1, %c0_2] : memref<133x256xbf16, #tpu.memory_space<vmem>>, vector<133x256xbf16>
    %cst = arith.constant dense<0.000000e+00> : vector<32x256xf32>
    %3 = tpu.matmul %1, %2, %cst {dimension_numbers = #tpu.dot_dimension_numbers<[1], [0], [0], [1], [0, 0, 1, 1], [], []>} : vector<32x133xbf16>, vector<133x256xbf16>, vector<32x256xf32> -> vector<32x256xf32>
    %c0_3 = arith.constant 0 : index
    %c0_4 = arith.constant 0 : index
    %4 = vector.load %arg3[%c0_3, %c0_4] : memref<1x256xf32, #tpu.memory_space<vmem>>, vector<1x256xf32>
    %5 = vector.broadcast %4 : vector<1x256xf32> to vector<32x256xf32>
    %6 = arith.addf %3, %5 : vector<32x256xf32>
    %cst_5 = arith.constant 0.000000e+00 : f32
    %7 = vector.broadcast %cst_5 : f32 to vector<32x256xf32>
    %8 = arith.maximumf %6, %7 : vector<32x256xf32>
    %9 = arith.truncf %8 : vector<32x256xf32> to vector<32x256xbf16>
    %c0_6 = arith.constant 0 : index
    %c0_7 = arith.constant 0 : index
    %10 = vector.load %arg4[%c0_6, %c0_7] : memref<256x10xbf16, #tpu.memory_space<vmem>>, vector<256x10xbf16>
    %cst_8 = arith.constant dense<0.000000e+00> : vector<32x10xf32>
    %11 = tpu.matmul %9, %10, %cst_8 {dimension_numbers = #tpu.dot_dimension_numbers<[1], [0], [0], [1], [0, 0, 1, 1], [], []>} : vector<32x256xbf16>, vector<256x10xbf16>, vector<32x10xf32> -> vector<32x10xf32>
    %c0_9 = arith.constant 0 : index
    %c0_10 = arith.constant 0 : index
    %12 = vector.load %arg5[%c0_9, %c0_10] : memref<1x10xf32, #tpu.memory_space<vmem>>, vector<1x10xf32>
    %13 = vector.broadcast %12 : vector<1x10xf32> to vector<32x10xf32>
    %14 = arith.addf %11, %13 : vector<32x10xf32>
    %c0_11 = arith.constant 0 : index
    %c0_12 = arith.constant 0 : index
    %15 = vector.load %arg6[%c0_11, %c0_12] : memref<32x10xf32, #tpu.memory_space<vmem>>, vector<32x10xf32>
    tpu.vector_store %arg6[%c0_11, %c0_12], %14 {strides = array<i32>} : memref<32x10xf32, #tpu.memory_space<vmem>>, vector<32x10xf32>,
    return
  }
  func.func @transform_0(%arg0: i32) -> (i32, i32) {
    %c0_i32 = arith.constant 0 : i32
    %c0_i32_0 = arith.constant 0 : i32
    return %arg0, %c0_i32 : i32, i32
  }
  func.func @transform_1(%arg0: i32) -> (i32, i32) {
    %c0_i32 = arith.constant 0 : i32
    %c0_i32_0 = arith.constant 0 : i32
    %c0_i32_1 = arith.constant 0 : i32
    return %c0_i32, %c0_i32_0 : i32, i32
  }
  func.func @transform_2(%arg0: i32) -> (i32, i32) {
    %c0_i32 = arith.constant 0 : i32
    %c0_i32_0 = arith.constant 0 : i32
    %c0_i32_1 = arith.constant 0 : i32
    return %c0_i32, %c0_i32_0 : i32, i32
  }
  func.func @transform_3(%arg0: i32) -> (i32, i32) {
    %c0_i32 = arith.constant 0 : i32
    %c0_i32_0 = arith.constant 0 : i32
    %c0_i32_1 = arith.constant 0 : i32
    return %c0_i32, %c0_i32_0 : i32, i32
  }
  func.func @transform_4(%arg0: i32) -> (i32, i32) {
    %c0_i32 = arith.constant 0 : i32
    %c0_i32_0 = arith.constant 0 : i32
    %c0_i32_1 = arith.constant 0 : i32
    return %c0_i32, %c0_i32_0 : i32, i32
  }
  func.func @transform_5(%arg0: i32) -> (i32, i32) {
    %c0_i32 = arith.constant 0 : i32
    %c0_i32_0 = arith.constant 0 : i32
    return %arg0, %c0_i32 : i32, i32
  }
}

</mosaic_0001>

<llo_original>
// kernel: ai_model_forward.1
$region0: #{ai_model_forward.1}
  #allocation0 [shape = 'u32[]', space=smem, size = 0x4, offset = 0x4, fixed_abs, tag = 'smem constant byte address 0x4 - core index']
  #allocation1 [shape = 'u32[144,128]{1,0:T(1,128)}', space=vmem, size = 0x12000, scoped, tag = 'internal scratch']
  %s0 = inlined_call_operand.hbm [shape: f32[32,133], index: 0, kind: input, shape index: {}]
  %s1 = inlined_call_operand.vmem [shape: bf16[133,256], index: 1, kind: input, shape index: {}]
  %s2 = inlined_call_operand.vmem [shape: f32[1,256], index: 2, kind: input, shape index: {}]
  %s3 = inlined_call_operand.vmem [shape: bf16[256,10], index: 3, kind: input, shape index: {}]
  %s4 = inlined_call_operand.vmem [shape: f32[1,10], index: 4, kind: input, shape index: {}]
  %s5 = inlined_call_operand.vmem [shape: f32[32,10], index: 5, kind: output, shape index: {}]
  %s6 = sld [smem:[#allocation0]]
  $region34: #{ai_model_forward.1} parent=0
    _
  %s8 = ssub.s32 1, %s6
  %s9 = scalar_select 0, %s8, %s6
  $region1: #{ai_model_forward.1} parent=0
    #allocation2 [shape = 'u8[32768]{0}', space=vmem, size = 0x8000, scoped, tag = 'input window, operand 0, single buffered']
    #allocation3 [shape = 's32[1]{0}', space=sflag, size = 0x4, scoped, tag = 'scoped memory for ai_model_forward.1']
    %10 = vsyncpa [#allocation3], 0
    // Predicated region
    $region2: #{ai_model_forward.1} parent=1 // pred_check
      _
    $region3: #{ai_model_forward.1} parent=1 // pred_check_branch
      %12 = sbr.rel (0) target = $region5
    $region4: #{ai_model_forward.1} parent=1 // pred_region
      %s14 = ssub.s32 1024, 1024
      %15 = vsyncadd [#allocation3], %s14
      %s16 = sshll.u32 [#allocation2], 4
      %s17 = int_to_ptr.vmem [resolvable:$true] %s16
      %22 = dma.hbm_to_vmem [thread:$0]  %s0, 1024, %s17, [#allocation3], 256, 256, 16
    $region5: #{ai_model_forward.1} parent=1 // pred_fallthru
      _
    // Predicated region
    $region6: #{ai_model_forward.1} parent=1 // pred_check
      _
    $region7: #{ai_model_forward.1} parent=1 // pred_check_branch
      %24 = sbr.rel (0) target = $region9
    $region8: #{ai_model_forward.1} parent=1 // pred_region
      _
    $region9: #{ai_model_forward.1} parent=1 // pred_fallthru
      _
    // Predicated region
    $region10: #{ai_model_forward.1} parent=1 // pred_check
      _
    $region11: #{ai_model_forward.1} parent=1 // pred_check_branch
      %26 = sbr.rel (0) target = $region13
    $region12: #{ai_model_forward.1} parent=1 // pred_region
      _
    $region13: #{ai_model_forward.1} parent=1 // pred_fallthru
      _
    // Predicated region
    $region14: #{ai_model_forward.1} parent=1 // pred_check
      _
    $region15: #{ai_model_forward.1} parent=1 // pred_check_branch
      %28 = sbr.rel (0) target = $region17
    $region16: #{ai_model_forward.1} parent=1 // pred_region
      _
    $region17: #{ai_model_forward.1} parent=1 // pred_fallthru
      _
    // Predicated region
    $region18: #{ai_model_forward.1} parent=1 // pred_check
      _
    $region19: #{ai_model_forward.1} parent=1 // pred_check_branch
      %30 = sbr.rel (0) target = $region21
    $region20: #{ai_model_forward.1} parent=1 // pred_region
      _
    $region21: #{ai_model_forward.1} parent=1 // pred_fallthru
      _
    // Predicated region
    $region22: #{ai_model_forward.1} parent=1 // pred_check
      _
    $region23: #{ai_model_forward.1} parent=1 // pred_check_branch
      %32 = sbr.rel (0) target = $region25
    $region24: #{ai_model_forward.1} parent=1 // pred_region
      %33 = dma.done [#allocation3], 1024
    $region25: #{ai_model_forward.1} parent=1 // pred_fallthru
      _
    %v35 = vld [vmem:[#allocation2] sm:$0xff]
    %v36 = vld [vmem:[#allocation2 + $0x8] sm:$0xff]
    %v37 = vld [vmem:[#allocation2 + $0x10] sm:$0xff]
    %v38 = vld [vmem:[#allocation2 + $0x18] sm:$0xff]
    %v39 = vld [vmem:[#allocation2 + $0x20] sm:$0xff]
    %v40 = vld [vmem:[#allocation2 + $0x28] sm:$0xff]
    %v41 = vld [vmem:[#allocation2 + $0x30] sm:$0xff]
    %v42 = vld [vmem:[#allocation2 + $0x38] sm:$0xff]
    %v43 = vpack.c.bf16 %v37, %v35
    %v44 = vpack.c.bf16 %v38, %v36
    %v45 = vpack.c.bf16 %v41, %v39
    %v46 = vpack.c.bf16 %v42, %v40
    %v47 = vld [vmem:[%s1] sm:$0xff]
    %v48 = vld [vmem:[%s1 + $0x8] sm:$0xff]
    %v49 = vld [vmem:[%s1 + $0x10] sm:$0xff]
    %v50 = vld [vmem:[%s1 + $0x18] sm:$0xff]
    %v51 = vld [vmem:[%s1 + $0x20] sm:$0xff]
    %v52 = vld [vmem:[%s1 + $0x28] sm:$0xff]
    %v53 = vld [vmem:[%s1 + $0x30] sm:$0xff]
    %v54 = vld [vmem:[%s1 + $0x38] sm:$0xff]
    %v55 = vld [vmem:[%s1 + $0x40] sm:$0xff]
    %v56 = vld [vmem:[%s1 + $0x48] sm:$0xff]
    %v57 = vld [vmem:[%s1 + $0x50] sm:$0xff]
    %v58 = vld [vmem:[%s1 + $0x58] sm:$0xff]
    %v59 = vld [vmem:[%s1 + $0x60] sm:$0xff]
    %v60 = vld [vmem:[%s1 + $0x68] sm:$0xff]
    %v61 = vld [vmem:[%s1 + $0x70] sm:$0xff]
    %v62 = vld [vmem:[%s1 + $0x78] sm:$0xff]
    %v63 = vld [vmem:[%s1 + $0x80] sm:$0x77]
    %v64 = vld [vmem:[%s2] sm:$0x3]
    %v66 = vlaneseq
    %v67 = vshrl.u32 %v66, 7
    %v68 = vsub.s32 0, %v67
    %v69 = vrot.slane %v64, %v68
    %v70 = vlaneseq
    %v71 = vshrl.u32 %v70, 7
    %v72 = vsub.s32 1, %v71
    %v73 = vrot.slane %v64, %v72
    %v93 = vunpack.c.l.b16 %v47
    %v94 = vunpack.c.h.b16 %v47
    %v95 = vunpack.c.l.b16 %v48
    %v96 = vunpack.c.h.b16 %v48
    %v97 = vunpack.c.l.b16 %v49
    %v98 = vunpack.c.h.b16 %v49
    %v99 = vunpack.c.l.b16 %v50
    %v100 = vunpack.c.h.b16 %v50
    %v101 = vunpack.c.l.b16 %v51
    %v102 = vunpack.c.h.b16 %v51
    %v103 = vunpack.c.l.b16 %v52
    %v104 = vunpack.c.h.b16 %v52
    %v105 = vunpack.c.l.b16 %v53
    %v106 = vunpack.c.h.b16 %v53
    %v107 = vunpack.c.l.b16 %v54
    %v108 = vunpack.c.h.b16 %v54
    %v109 = vunpack.c.l.b16 %v55
    %v110 = vunpack.c.h.b16 %v55
    %v111 = vunpack.c.l.b16 %v56
    %v112 = vunpack.c.h.b16 %v56
    %v113 = vunpack.c.l.b16 %v57
    %v114 = vunpack.c.h.b16 %v57
    %v115 = vunpack.c.l.b16 %v58
    %v116 = vunpack.c.h.b16 %v58
    %v117 = vunpack.c.l.b16 %v59
    %v118 = vunpack.c.h.b16 %v59
    %v119 = vunpack.c.l.b16 %v60
    %v120 = vunpack.c.h.b16 %v60
    %v121 = vunpack.c.l.b16 %v61
    %v122 = vunpack.c.h.b16 %v61
    %v123 = vunpack.c.l.b16 %v62
    %v124 = vunpack.c.h.b16 %v62
    %v125 = vunpack.c.l.b16 %v63
    %v126 = vunpack.c.h.b16 %v63
    %v127 = vpack.c.b16 %v95, %v93
    %v128 = vpack.c.b16 %v96, %v94
    %v129 = vpack.c.b16 %v99, %v97
    %v130 = vpack.c.b16 %v100, %v98
    %v131 = vpack.c.b16 %v103, %v101
    %v132 = vpack.c.b16 %v104, %v102
    %v133 = vpack.c.b16 %v107, %v105
    %v134 = vpack.c.b16 %v108, %v106
    %v135 = vpack.c.b16 %v111, %v109
    %v136 = vpack.c.b16 %v112, %v110
    %v137 = vpack.c.b16 %v115, %v113
    %v138 = vpack.c.b16 %v116, %v114
    %v139 = vpack.c.b16 %v119, %v117
    %v140 = vpack.c.b16 %v120, %v118
    %v141 = vpack.c.b16 %v123, %v121
    %v142 = vpack.c.b16 %v124, %v122
    %v143 = vpack.c.b16 %v125, %v125
    %v144 = vpack.c.b16 %v126, %v126
    %vm161 = vcmask 39936
    %v163 = vsel %vm161, %v44, 0
    %v166 = vsel %vm161, %v46, 0
    %vm168 = vcmask 1041408
    %vm169 = vcmask 1042432
    %v170 = vsel %vm168, 4294967295, 65535
    %v171 = vsel %vm169, %v170, 0
    %v173 = vand.u32 %v143, %v171
    %v176 = vand.u32 %v144, %v171
    %178 = vmatprep.subr.bf16.mxu0 %v128
    %179 = vmatpush1.bf16.msra.mxu0 %v127
    %180 = vmatprep.subr.bf16.mxu0 %v130
    %181 = vmatpush1.bf16.msra.mxu0 %v129
    %182 = vmatprep.subr.bf16.mxu0 %v132
    %183 = vmatpush1.bf16.msra.mxu0 %v131
    %184 = vmatprep.subr.bf16.mxu0 %v134
    %185 = vmatpush1.bf16.msra.mxu0 %v133
    %186 = vmatprep.subr.bf16.mxu0 %v136
    %187 = vmatpush1.bf16.msra.mxu0 %v135
    %188 = vmatprep.subr.bf16.mxu0 %v138
    %189 = vmatpush1.bf16.msra.mxu0 %v137
    %190 = vmatprep.subr.bf16.mxu0 %v140
    %191 = vmatpush1.bf16.msra.mxu0 %v139
    %192 = vmatprep.subr.bf16.mxu0 %v142
    %193 = vmatpush1.bf16.msra.mxu0 %v141
    %194 = vmatprep.subr.bf16.mxu0 %v176
    %195 = vmatpush1.bf16.msra.mxu0 %v173
    %196 = vmatprep.subr.bf16.mxu0 0
    %197 = vmatpush1.bf16.msra.mxu0 0
    %198 = vmatprep.subr.bf16.mxu0 0
    %199 = vmatpush1.bf16.msra.mxu0 0
    %200 = vmatprep.subr.bf16.mxu0 0
    %201 = vmatpush1.bf16.msra.mxu0 0
    %202 = vmatprep.subr.bf16.mxu0 0
    %203 = vmatpush1.bf16.msra.mxu0 0
    %204 = vmatprep.subr.bf16.mxu0 0
    %205 = vmatpush1.bf16.msra.mxu0 0
    %206 = vmatprep.subr.bf16.mxu0 0
    %207 = vmatpush1.bf16.msra.mxu0 0
    %208 = vmatprep.subr.bf16.mxu0 0
    %209 = vmatpush1.bf16.msra.mxu0 0
    %210 = vmatprep.mubr.bf16.mxu0 %v163
    %211 = vmatmul.mubr.bf16.gmra.mrb[0].mxu0 %v43
    %v212 = vpop.f32.mrb[0].mxu0
    %v213 = vadd.f32 %v69, %v212
    %v214 = vpop.f32.mrb[0].mxu0
    %v215 = vadd.f32 %v73, %v214
    %v216 = vpop.f32.mrb[0].mxu0
    %v217 = vadd.f32 %v69, %v216
    %v218 = vpop.f32.mrb[0].mxu0
    %v219 = vadd.f32 %v73, %v218
    %220 = vmatprep.mubr.bf16.mxu0 %v166
    %221 = vmatmul.mubr.bf16.gmra.mrb[0].mxu0 %v45
    %v222 = vpop.f32.mrb[0].mxu0
    %v223 = vadd.f32 %v69, %v222
    %v224 = vpop.f32.mrb[0].mxu0
    %v225 = vadd.f32 %v73, %v224
    %v226 = vpop.f32.mrb[0].mxu0
    %v227 = vadd.f32 %v69, %v226
    %v228 = vpop.f32.mrb[0].mxu0
    %v229 = vadd.f32 %v73, %v228
    %230 = vdwg.mxu0
    %v231 = vmax.f32 %v213, 0.0
    %v232 = vmax.f32 %v215, 0.0
    %v233 = vmax.f32 %v217, 0.0
    %v234 = vmax.f32 %v219, 0.0
    %v235 = vmax.f32 %v223, 0.0
    %v236 = vmax.f32 %v225, 0.0
    %v237 = vmax.f32 %v227, 0.0
    %v238 = vmax.f32 %v229, 0.0
    %v239 = vpack.c.bf16 %v233, %v231
    %v240 = vpack.c.bf16 %v234, %v232
    %v241 = vpack.c.bf16 %v237, %v235
    %v242 = vpack.c.bf16 %v238, %v236
    %v243 = vld [vmem:[%s3] sm:$0xf]
    %v244 = vld [vmem:[%s3 + $0x4] sm:$0xf]
    %v245 = vld [vmem:[%s3 + $0x8] sm:$0xf]
    %v246 = vld [vmem:[%s3 + $0xc] sm:$0xf]
    %v247 = vld [vmem:[%s3 + $0x10] sm:$0xf]
    %v248 = vld [vmem:[%s3 + $0x14] sm:$0xf]
    %v249 = vld [vmem:[%s3 + $0x18] sm:$0xf]
    %v250 = vld [vmem:[%s3 + $0x1c] sm:$0xf]
    %v251 = vld [vmem:[%s3 + $0x20] sm:$0xf]
    %v252 = vld [vmem:[%s3 + $0x24] sm:$0xf]
    %v253 = vld [vmem:[%s3 + $0x28] sm:$0xf]
    %v254 = vld [vmem:[%s3 + $0x2c] sm:$0xf]
    %v255 = vld [vmem:[%s3 + $0x30] sm:$0xf]
    %v256 = vld [vmem:[%s3 + $0x34] sm:$0xf]
    %v257 = vld [vmem:[%s3 + $0x38] sm:$0xf]
    %v258 = vld [vmem:[%s3 + $0x3c] sm:$0xf]
    %v259 = vld [vmem:[%s3 + $0x40] sm:$0xf]
    %v260 = vld [vmem:[%s3 + $0x44] sm:$0xf]
    %v261 = vld [vmem:[%s3 + $0x48] sm:$0xf]
    %v262 = vld [vmem:[%s3 + $0x4c] sm:$0xf]
    %v263 = vld [vmem:[%s3 + $0x50] sm:$0xf]
    %v264 = vld [vmem:[%s3 + $0x54] sm:$0xf]
    %v265 = vld [vmem:[%s3 + $0x58] sm:$0xf]
    %v266 = vld [vmem:[%s3 + $0x5c] sm:$0xf]
    %v267 = vld [vmem:[%s3 + $0x60] sm:$0xf]
    %v268 = vld [vmem:[%s3 + $0x64] sm:$0xf]
    %v269 = vld [vmem:[%s3 + $0x68] sm:$0xf]
    %v270 = vld [vmem:[%s3 + $0x6c] sm:$0xf]
    %v271 = vld [vmem:[%s3 + $0x70] sm:$0xf]
    %v272 = vld [vmem:[%s3 + $0x74] sm:$0xf]
    %v273 = vld [vmem:[%s3 + $0x78] sm:$0xf]
    %v274 = vld [vmem:[%s3 + $0x7c] sm:$0xf]
    %v275 = vld [vmem:[%s4] sm:$0x1]
    %v277 = vlaneseq
    %v278 = vshrl.u32 %v277, 7
    %v279 = vsub.s32 0, %v278
    %v280 = vrot.slane %v275, %v279
    %v314 = vunpack.c.l.b16 %v243
    %v315 = vunpack.c.l.b16 %v244
    %v316 = vunpack.c.l.b16 %v245
    %v317 = vunpack.c.l.b16 %v246
    %v318 = vunpack.c.l.b16 %v247
    %v319 = vunpack.c.l.b16 %v248
    %v320 = vunpack.c.l.b16 %v249
    %v321 = vunpack.c.l.b16 %v250
    %v322 = vunpack.c.l.b16 %v251
    %v323 = vunpack.c.l.b16 %v252
    %v324 = vunpack.c.l.b16 %v253
    %v325 = vunpack.c.l.b16 %v254
    %v326 = vunpack.c.l.b16 %v255
    %v327 = vunpack.c.l.b16 %v256
    %v328 = vunpack.c.l.b16 %v257
    %v329 = vunpack.c.l.b16 %v258
    %v330 = vunpack.c.l.b16 %v259
    %v331 = vunpack.c.l.b16 %v260
    %v332 = vunpack.c.l.b16 %v261
    %v333 = vunpack.c.l.b16 %v262
    %v334 = vunpack.c.l.b16 %v263
    %v335 = vunpack.c.l.b16 %v264
    %v336 = vunpack.c.l.b16 %v265
    %v337 = vunpack.c.l.b16 %v266
    %v338 = vunpack.c.l.b16 %v267
    %v339 = vunpack.c.l.b16 %v268
    %v340 = vunpack.c.l.b16 %v269
    %v341 = vunpack.c.l.b16 %v270
    %v342 = vunpack.c.l.b16 %v271
    %v343 = vunpack.c.l.b16 %v272
    %v344 = vunpack.c.l.b16 %v273
    %v345 = vunpack.c.l.b16 %v274
    %v346 = vpack.c.b16 %v315, %v314
    %v347 = vpack.c.b16 %v317, %v316
    %v348 = vpack.c.b16 %v319, %v318
    %v349 = vpack.c.b16 %v321, %v320
    %v350 = vpack.c.b16 %v323, %v322
    %v351 = vpack.c.b16 %v325, %v324
    %v352 = vpack.c.b16 %v327, %v326
    %v353 = vpack.c.b16 %v329, %v328
    %v354 = vpack.c.b16 %v331, %v330
    %v355 = vpack.c.b16 %v333, %v332
    %v356 = vpack.c.b16 %v335, %v334
    %v357 = vpack.c.b16 %v337, %v336
    %v358 = vpack.c.b16 %v339, %v338
    %v359 = vpack.c.b16 %v341, %v340
    %v360 = vpack.c.b16 %v343, %v342
    %v361 = vpack.c.b16 %v345, %v344
    %378 = vmatprep.subr.bf16.mxu0 0
    %379 = vmatpush1.bf16.msra.mxu0 %v346
    %380 = vmatprep.subr.bf16.mxu0 0
    %381 = vmatpush1.bf16.msra.mxu0 %v347
    %382 = vmatprep.subr.bf16.mxu0 0
    %383 = vmatpush1.bf16.msra.mxu0 %v348
    %384 = vmatprep.subr.bf16.mxu0 0
    %385 = vmatpush1.bf16.msra.mxu0 %v349
    %386 = vmatprep.subr.bf16.mxu0 0
    %387 = vmatpush1.bf16.msra.mxu0 %v350
    %388 = vmatprep.subr.bf16.mxu0 0
    %389 = vmatpush1.bf16.msra.mxu0 %v351
    %390 = vmatprep.subr.bf16.mxu0 0
    %391 = vmatpush1.bf16.msra.mxu0 %v352
    %392 = vmatprep.subr.bf16.mxu0 0
    %393 = vmatpush1.bf16.msra.mxu0 %v353
    %394 = vmatprep.subr.bf16.mxu0 0
    %395 = vmatpush1.bf16.msra.mxu0 %v354
    %396 = vmatprep.subr.bf16.mxu0 0
    %397 = vmatpush1.bf16.msra.mxu0 %v355
    %398 = vmatprep.subr.bf16.mxu0 0
    %399 = vmatpush1.bf16.msra.mxu0 %v356
    %400 = vmatprep.subr.bf16.mxu0 0
    %401 = vmatpush1.bf16.msra.mxu0 %v357
    %402 = vmatprep.subr.bf16.mxu0 0
    %403 = vmatpush1.bf16.msra.mxu0 %v358
    %404 = vmatprep.subr.bf16.mxu0 0
    %405 = vmatpush1.bf16.msra.mxu0 %v359
    %406 = vmatprep.subr.bf16.mxu0 0
    %407 = vmatpush1.bf16.msra.mxu0 %v360
    %408 = vmatprep.subr.bf16.mxu0 0
    %409 = vmatpush1.bf16.msra.mxu0 %v361
    %410 = vmatprep.mubr.bf16.mxu0 %v240
    %411 = vmatmul.mubr.bf16.gmra.mrb[0].mxu0 %v239
    %v412 = vpop.f32.mrb[0].mxu0
    %v413 = vadd.f32 %v280, %v412
    %v414 = vpop.f32.mrb[0].mxu0
    %v415 = vpop.f32.mrb[0].mxu0
    %v416 = vadd.f32 %v280, %v415
    %v417 = vpop.f32.mrb[0].mxu0
    %418 = vmatprep.mubr.bf16.mxu0 %v242
    %419 = vmatmul.mubr.bf16.gmra.mrb[0].mxu0 %v241
    %v420 = vpop.f32.mrb[0].mxu0
    %v421 = vadd.f32 %v280, %v420
    %v422 = vpop.f32.mrb[0].mxu0
    %v423 = vpop.f32.mrb[0].mxu0
    %v424 = vadd.f32 %v280, %v423
    %v425 = vpop.f32.mrb[0].mxu0
    %426 = vdwg.mxu0
    %vm427 = vcmask 80896
    %428 = vst.msk [vmem:[%s5] sm:$0xff] %vm427, %v413
    %429 = vst.msk [vmem:[%s5 + $0x8] sm:$0xff] %vm427, %v416
    %430 = vst.msk [vmem:[%s5 + $0x10] sm:$0xff] %vm427, %v421
    %431 = vst.msk [vmem:[%s5 + $0x18] sm:$0xff] %vm427, %v424
    // Predicated region
    $region26: #{ai_model_forward.1} parent=1 // pred_check
      _
    $region27: #{ai_model_forward.1} parent=1 // pred_check_branch
      %433 = sbr.rel (0) target = $region29
    $region28: #{ai_model_forward.1} parent=1 // pred_region
      _
    $region29: #{ai_model_forward.1} parent=1 // pred_fallthru
      _
    // Predicated region
    $region30: #{ai_model_forward.1} parent=1 // pred_check
      _
    $region31: #{ai_model_forward.1} parent=1 // pred_check_branch
      %435 = sbr.rel (0) target = $region33
    $region32: #{ai_model_forward.1} parent=1 // pred_region
      _
    $region33: #{ai_model_forward.1} parent=1 // pred_fallthru
      _
    %436 = vsyncpa [#allocation3], 1

</llo_original>
